<compile_context>
chip_gen: v6e
topology: v6e:2x2x1
jax: 0.10.0
libtpu: 0.0.40
codegen_flags: <defaults>
</compile_context>

<pallas_src>
import math
from functools import partial

import jax
import jax.numpy as jnp
from jax.experimental import pallas as pl
from jax.experimental.pallas import tpu as pltpu


# ----------------------------- configuration ------------------------------ #
class Args:
    state_shape = 6
    obs_shape = 5
    n_actions = 3
    rnn_hidden_dim = 16
    n_agents = 4
    DWN_proj = 32          # embed_dim of the denoiser
    DWM_hidden_dim = 64    # width of the ResidualMLP
    DWM_num_layers = 2     # depth of the ResidualMLP
    DWM_activation = "silu"
    DWM_layer_norm = True
    DWM_embed_dim = 32     # hidden dim of the time MLP


ARGS = Args()
D_IN = ARGS.state_shape + 1 + ARGS.obs_shape                                       # 12
COND_DIM = ARGS.obs_shape + ARGS.n_actions + ARGS.rnn_hidden_dim + ARGS.n_agents   # 28
D_TOT = D_IN + COND_DIM                                                            # 40
D_OUT = D_IN                                                                       # 12
EMBED = ARGS.DWN_proj                                                              # 32
WIDTH = ARGS.DWM_hidden_dim                                                        # 64
DEPTH = ARGS.DWM_num_layers                                                        # 2
SINU_DIM = 16                                                                      # learned_sinusoidal_dim
FOURIER_DIM = SINU_DIM + 1                                                         # 17
LN_EPS = 1e-5
TM_MAX = 2048   # token tile cap: amortizes per-step overhead; ~1-2 MiB VMEM


def _elemwise_dtype():
    """bf16 elementwise only on chips with a bf16 VPU/EUP (v6e, v7x)."""
    try:
        kind = jax.devices()[0].device_kind.lower()
    except Exception:
        return jnp.float32
    if ("v6" in kind) or ("v7" in kind) or ("tpu7" in kind):
        return jnp.bfloat16
    return jnp.float32


CDTYPE = _elemwise_dtype()


def _silu(x):
    return x * jax.nn.sigmoid(x)


def _round_up(v, m):
    return ((v + m - 1) // m) * m


# ------------------------------ Pallas kernel ------------------------------ #
def denoiser_kernel(x_ref, waug_ref, wblk_ref, consts_ref, wout_ref, bout_ref,
                    o_ref, *, cdtype):
    """One tile of TM tokens: fused (proj + t-emb + input-layer + per-batch
    bias) matmul, DEPTH residual blocks, output layer.  MXU operands bf16."""
    # x_aug's last B columns are one-hot batch indicators; W_aug's last B rows
    # are the per-batch fused biases -> a single bf16 matmul does proj,
    # time-embed add and the ResidualMLP input layer.
    h = jnp.dot(x_ref[...], waug_ref[...],
                preferred_element_type=jnp.float32)            # (TM, WIDTH) f32

    consts = consts_ref[...]                                   # (3*DEPTH, WIDTH), cdtype
    inv_w = 1.0 / float(h.shape[-1])

    # --- residual blocks (static unroll over depth) ------------------------ #
    for d in range(DEPTH):
        y = h
        # single-pass LayerNorm stats in f32 (two independent reductions)
        s1 = jnp.sum(y, axis=-1, keepdims=True)
        s2 = jnp.sum(y * y, axis=-1, keepdims=True)
        mu = s1 * inv_w
        var = jnp.maximum(s2 * inv_w - mu * mu, 0.0)           # guard cancellation
        yn = (y - mu) * jax.lax.rsqrt(var + LN_EPS)
        # affine + SiLU in the (possibly bf16) elementwise dtype
        yn = yn.astype(cdtype)
        yn = yn * consts[d:d + 1] + consts[DEPTH + d:DEPTH + d + 1]
        yn = _silu(yn)
        blk = jnp.dot(yn.astype(jnp.bfloat16), wblk_ref[d],
                      preferred_element_type=jnp.float32)      # (TM, WIDTH) f32
        # residual add + block bias in f32
        h = h + blk + consts[2 * DEPTH + d:2 * DEPTH + d + 1].astype(jnp.float32)

    # --- output layer ------------------------------------------------------ #
    ho = _silu(h.astype(cdtype)).astype(jnp.bfloat16)
    out = jnp.dot(ho, wout_ref[...], preferred_element_type=jnp.float32)
    out = out + bout_ref[...]
    o_ref[...] = out.astype(o_ref.dtype)


def denoiser_pallas(x_aug, w_aug, w_blk, consts, w_out, b_out, *, out_dtype):
    """x_aug: (N, D_TOT + B) bf16 tokens.  Returns (N, D_OUT) in out_dtype."""
    n, d_aug = x_aug.shape

    # Token tile: >= 2 grid steps whenever possible (so the "parallel" axis
    # shards across v7x's two TensorCores), capped at TM_MAX to amortize
    # per-step overhead.  The ragged last block is handled by Pallas (garbage
    # padded rows in, masked out-of-bounds writes dropped; all math row-local).
    tm = min(TM_MAX, max(8, _round_up((n + 1) // 2, 8)))
    grid_m = (n + tm - 1) // tm

    full = lambda *shape: pl.BlockSpec(shape, lambda i: (0,) * len(shape))
    in_specs = [
        pl.BlockSpec((tm, d_aug), lambda i: (i, 0)),   # x tile (only big stream)
        full(*w_aug.shape),                            # [W_proj @ W_in ; b_fused]
        full(*w_blk.shape),                            # residual block weights
        full(*consts.shape),                           # [ln_gamma; ln_beta; b_blk]
        full(*w_out.shape),                            # W_out
        full(*b_out.shape),                            # b_out
    ]
    out_specs = pl.BlockSpec((tm, D_OUT), lambda i: (i, 0))

    return pl.pallas_call(
        partial(denoiser_kernel, cdtype=CDTYPE),
        out_shape=jax.ShapeDtypeStruct((n, D_OUT), out_dtype),
        grid_spec=pltpu.PrefetchScalarGridSpec(
            num_scalar_prefetch=0,
            grid=(grid_m,),
            in_specs=in_specs,
            out_specs=out_specs,
        ),
        # single fully-parallel token axis -> shards across v7x's 2 TensorCores
        compiler_params=pltpu.CompilerParams(dimension_semantics=("parallel",)),
    )(x_aug, w_aug, w_blk, consts, w_out, b_out)


# -------------------------- time MLP (plain JAX glue) ----------------------- #
def time_mlp(timesteps, params):
    """RandomOrLearnedSinusoidalPosEmb(16) -> Linear(17,32) -> SiLU -> Linear(32,32)."""
    x1 = timesteps[:, None].astype(jnp.float32)                        # (B, 1)
    freqs = x1 * params["fourier_w"][None, :] * (2.0 * math.pi)        # (B, 8)
    fouriered = jnp.concatenate([x1, jnp.sin(freqs), jnp.cos(freqs)], axis=-1)  # (B, 17)
    h = fouriered @ params["wt1"] + params["bt1"]                      # (B, DWM_embed_dim)
    h = _silu(h)
    t_emb = h @ params["wt2"] + params["bt2"]                          # (B, DWN_proj)
    return t_emb


# ------------------------------- full forward ------------------------------- #
def denoiser_forward(traj, timesteps, params):
    """traj: (B, T, n_agents, D_TOT), timesteps: (B,)  ->  (B, T, n_agents, D_OUT)."""
    b, t, a, d_tot = traj.shape
    t_emb = time_mlp(timesteps, params)                                # (B, EMBED), f32

    # Fold proj + time-embedding + ResidualMLP input layer (exact algebra, f32):
    #   (x @ W_proj + b_proj + t_emb) @ W_in + b_in
    #     == x @ (W_proj @ W_in) + ((b_proj + t_emb) @ W_in + b_in)
    w_fused = params["w_proj"] @ params["w_in"]                        # (D_TOT, WIDTH)
    b_fused = (params["b_proj"] + t_emb) @ params["w_in"] + params["b_in"]  # (B, WIDTH)
    # per-batch fused bias rows stacked under the weight; rounded to bf16 once
    w_aug = jnp.concatenate([w_fused, b_fused], axis=0).astype(jnp.bfloat16)

    # Append B one-hot batch-indicator columns so the per-batch bias is picked
    # up by the same matmul (no in-kernel iota / one-hot work), and store the
    # token stream bf16 (halves the kernel's per-token HBM read).
    onehot = jnp.broadcast_to(
        jnp.eye(b, dtype=traj.dtype)[:, None, None, :], (b, t, a, b))
    x_aug = jnp.concatenate([traj, onehot], axis=-1).astype(jnp.bfloat16)
    x_aug = x_aug.reshape(b * t * a, d_tot + b)

    # pack small per-layer constants into one stream
    consts = jnp.concatenate(
        [params["ln_g"][:, 0, :], params["ln_b"][:, 0, :], params["b_blk"][:, 0, :]],
        axis=0).astype(CDTYPE)                                         # (3*DEPTH, WIDTH)

    y_flat = denoiser_pallas(
        x_aug, w_aug,
        params["w_blk"].astype(jnp.bfloat16), consts,
        params["w_out"].astype(jnp.bfloat16), params["b_out"],
        out_dtype=traj.dtype)
    return y_flat.reshape(b, t, a, D_OUT)


# ------------------------------ param init ---------------------------------- #
def init_params(key):
    ks = jax.random.split(key, 16)
    scale = 0.05
    p = {
        # RandomOrLearnedSinusoidalPosEmb weights (half_dim = 8), frozen (is_random)
        "fourier_w": jax.random.normal(ks[0], (SINU_DIM // 2,), jnp.float32),
        # time MLP
        "wt1": scale * jax.random.normal(ks[1], (FOURIER_DIM, ARGS.DWM_embed_dim), jnp.float32),
        "bt1": scale * jax.random.normal(ks[2], (ARGS.DWM_embed_dim,), jnp.float32),
        "wt2": scale * jax.random.normal(ks[3], (ARGS.DWM_embed_dim, ARGS.DWN_proj), jnp.float32),
        "bt2": scale * jax.random.normal(ks[4], (ARGS.DWN_proj,), jnp.float32),
        # proj
        "w_proj": scale * jax.random.normal(ks[5], (D_TOT, EMBED), jnp.float32),
        "b_proj": scale * jax.random.normal(ks[6], (1, EMBED), jnp.float32),
        # ResidualMLP
        "w_in": scale * jax.random.normal(ks[7], (EMBED, WIDTH), jnp.float32),
        "b_in": scale * jax.random.normal(ks[8], (1, WIDTH), jnp.float32),
        "w_blk": scale * jax.random.normal(ks[9], (DEPTH, WIDTH, WIDTH), jnp.float32),
        "b_blk": scale * jax.random.normal(ks[10], (DEPTH, 1, WIDTH), jnp.float32),
        "ln_g": jnp.ones((DEPTH, 1, WIDTH), jnp.float32),
        "ln_b": jnp.zeros((DEPTH, 1, WIDTH), jnp.float32),
        "w_out": scale * jax.random.normal(ks[11], (WIDTH, D_OUT), jnp.float32),
        "b_out": scale * jax.random.normal(ks[12], (1, D_OUT), jnp.float32),
    }
    return p


# ------------------------ reference (unfused, plain JAX, f32) ---------------- #
def denoiser_reference(traj, timesteps, params):
    B, T, A, _ = traj.shape
    t_emb = time_mlp(timesteps, params)
    t_emb = jnp.broadcast_to(t_emb[:, None, None, :], (B, T, A, EMBED))
    h = traj @ params["w_proj"] + params["b_proj"][0] + t_emb
    h = h @ params["w_in"] + params["b_in"][0]
    for d in range(DEPTH):
        y = h
        mu = jnp.mean(y, axis=-1, keepdims=True)
        var = jnp.mean((y - mu) ** 2, axis=-1, keepdims=True)
        y = (y - mu) * jax.lax.rsqrt(var + LN_EPS) * params["ln_g"][d, 0] + params["ln_b"][d, 0]
        y = _silu(y)
        y = y @ params["w_blk"][d] + params["b_blk"][d, 0]
        h = h + y
    h = _silu(h)
    return h @ params["w_out"] + params["b_out"][0]


# ---------------------------------- main ------------------------------------ #
if __name__ == "__main__":
    key = jax.random.PRNGKey(0)
    k_p, k_x, k_t, k_x2, k_t2 = jax.random.split(key, 5)

    params = init_params(k_p)
    fwd = jax.jit(denoiser_forward)

    # bf16 matmul operands vs. f32 reference -> modest tolerance
    ATOL = 3e-2
    RTOL = 3e-2

    # small shape consistent with the module: (B, T, n_agents, d_in + cond_dim)
    B, T, A = 2, 3, ARGS.n_agents                 # 24 tokens -> 2 ragged tiles
    traj = jax.random.normal(k_x, (B, T, A, D_TOT), jnp.float32)
    timesteps = jax.random.uniform(k_t, (B,), jnp.float32, 0.0, 1.0)

    y = jax.block_until_ready(fwd(traj, timesteps, params))
    y_ref = denoiser_reference(traj, timesteps, params)
    assert y.shape == (B, T, A, D_OUT), y.shape
    assert jnp.allclose(y, y_ref, atol=ATOL, rtol=RTOL), float(jnp.max(jnp.abs(y - y_ref)))

    # second shape: ragged last block + tiles crossing batch boundaries
    # (per-batch bias handled by the appended one-hot columns)
    B2, T2, A2 = 3, 7, ARGS.n_agents              # 84 tokens
    traj2 = jax.random.normal(k_x2, (B2, T2, A2, D_TOT), jnp.float32)
    timesteps2 = jax.random.uniform(k_t2, (B2,), jnp.float32, 0.0, 1.0)
    y2 = jax.block_until_ready(fwd(traj2, timesteps2, params))
    y2_ref = denoiser_reference(traj2, timesteps2, params)
    assert y2.shape == (B2, T2, A2, D_OUT), y2.shape
    assert jnp.allclose(y2, y2_ref, atol=ATOL, rtol=RTOL), float(jnp.max(jnp.abs(y2 - y2_ref)))

    print("KERNEL_OK")
</pallas_src>

<mosaic_0001>
module attributes {stable_mosaic.version = 11 : i64} {
  func.func @denoiser_kernel(%arg0: i32, %arg1: memref<16x42xbf16, #tpu.memory_space<vmem>>, %arg2: memref<42x64xbf16, #tpu.memory_space<vmem>>, %arg3: memref<2x64x64xbf16, #tpu.memory_space<vmem>>, %arg4: memref<6x64xf32, #tpu.memory_space<vmem>>, %arg5: memref<64x12xbf16, #tpu.memory_space<vmem>>, %arg6: memref<1x12xf32, #tpu.memory_space<vmem>>, %arg7: memref<16x12xf32, #tpu.memory_space<vmem>>) attributes {dimension_semantics = [#tpu.dimension_semantics<parallel>], iteration_bounds = array<i64: 2>, scalar_prefetch = 0 : i64, scratch_operands = 0 : i64, tpu.core_type = #tpu.core_type<tc>, window_params = [{transform_indices = @transform_0, window_bounds = array<i64: 16, 42>}, {pipeline_mode = #tpu.pipeline_mode<synchronous>, transform_indices = @transform_1, window_bounds = array<i64: 42, 64>}, {pipeline_mode = #tpu.pipeline_mode<synchronous>, transform_indices = @transform_2, window_bounds = array<i64: 2, 64, 64>}, {pipeline_mode = #tpu.pipeline_mode<synchronous>, transform_indices = @transform_3, window_bounds = array<i64: 6, 64>}, {pipeline_mode = #tpu.pipeline_mode<synchronous>, transform_indices = @transform_4, window_bounds = array<i64: 64, 12>}, {pipeline_mode = #tpu.pipeline_mode<synchronous>, transform_indices = @transform_5, window_bounds = array<i64: 1, 12>}, {transform_indices = @transform_6, window_bounds = array<i64: 16, 12>}]} {
    %c0 = arith.constant 0 : index
    %c0_0 = arith.constant 0 : index
    %0 = vector.load %arg1[%c0, %c0_0] : memref<16x42xbf16, #tpu.memory_space<vmem>>, vector<16x42xbf16>
    %c0_1 = arith.constant 0 : index
    %c0_2 = arith.constant 0 : index
    %1 = vector.load %arg2[%c0_1, %c0_2] : memref<42x64xbf16, #tpu.memory_space<vmem>>, vector<42x64xbf16>
    %cst = arith.constant dense<0.000000e+00> : vector<16x64xf32>
    %2 = tpu.matmul %0, %1, %cst {dimension_numbers = #tpu.dot_dimension_numbers<[1], [0], [0], [1], [0, 0, 1, 1], [], []>} : vector<16x42xbf16>, vector<42x64xbf16>, vector<16x64xf32> -> vector<16x64xf32>
    %c0_3 = arith.constant 0 : index
    %c0_4 = arith.constant 0 : index
    %3 = vector.load %arg4[%c0_3, %c0_4] : memref<6x64xf32, #tpu.memory_space<vmem>>, vector<6x64xf32>
    %cst_5 = arith.constant dense<0.000000e+00> : vector<16xf32>
    %4 = vector.multi_reduction <add>, %2, %cst_5 [1] : vector<16x64xf32> to vector<16xf32>
    %5 = vector.shape_cast %4 : vector<16xf32> to vector<16x1xf32>
    %6 = arith.mulf %2, %2 : vector<16x64xf32>
    %cst_6 = arith.constant dense<0.000000e+00> : vector<16xf32>
    %7 = vector.multi_reduction <add>, %6, %cst_6 [1] : vector<16x64xf32> to vector<16xf32>
    %8 = vector.shape_cast %7 : vector<16xf32> to vector<16x1xf32>
    %cst_7 = arith.constant 1.562500e-02 : f32
    %9 = vector.broadcast %cst_7 : f32 to vector<16x1xf32>
    %10 = arith.mulf %5, %9 : vector<16x1xf32>
    %cst_8 = arith.constant 1.562500e-02 : f32
    %11 = vector.broadcast %cst_8 : f32 to vector<16x1xf32>
    %12 = arith.mulf %8, %11 : vector<16x1xf32>
    %13 = arith.mulf %10, %10 : vector<16x1xf32>
    %14 = arith.subf %12, %13 : vector<16x1xf32>
    %cst_9 = arith.constant 0.000000e+00 : f32
    %15 = vector.broadcast %cst_9 : f32 to vector<16x1xf32>
    %16 = arith.maximumf %14, %15 : vector<16x1xf32>
    %17 = vector.broadcast %10 : vector<16x1xf32> to vector<16x64xf32>
    %18 = arith.subf %2, %17 : vector<16x64xf32>
    %cst_10 = arith.constant 9.99999974E-6 : f32
    %19 = vector.broadcast %cst_10 : f32 to vector<16x1xf32>
    %20 = arith.addf %16, %19 : vector<16x1xf32>
    %21 = math.rsqrt %20 : vector<16x1xf32>
    %22 = vector.broadcast %21 : vector<16x1xf32> to vector<16x64xf32>
    %23 = arith.mulf %18, %22 : vector<16x64xf32>
    %24 = vector.extract_strided_slice %3 {offsets = [0, 0], sizes = [1, 64], strides = [1, 1]} : vector<6x64xf32> to vector<1x64xf32>
    %25 = vector.broadcast %24 : vector<1x64xf32> to vector<16x64xf32>
    %26 = arith.mulf %23, %25 : vector<16x64xf32>
    %27 = vector.extract_strided_slice %3 {offsets = [2, 0], sizes = [1, 64], strides = [1, 1]} : vector<6x64xf32> to vector<1x64xf32>
    %28 = vector.broadcast %27 : vector<1x64xf32> to vector<16x64xf32>
    %29 = arith.addf %26, %28 : vector<16x64xf32>
    %30 = arith.negf %29 : vector<16x64xf32>
    %31 = math.exp %30 : vector<16x64xf32>
    %cst_11 = arith.constant 1.000000e+00 : f32
    %32 = vector.broadcast %cst_11 : f32 to vector<16x64xf32>
    %33 = arith.addf %32, %31 : vector<16x64xf32>
    %34 = arith.divf %32, %33 : vector<16x64xf32>
    %35 = arith.mulf %29, %34 : vector<16x64xf32>
    %36 = arith.truncf %35 : vector<16x64xf32> to vector<16x64xbf16>
    %c0_12 = arith.constant 0 : index
    %c0_13 = arith.constant 0 : index
    %c0_14 = arith.constant 0 : index
    %37 = vector.load %arg3[%c0_12, %c0_13, %c0_14] : memref<2x64x64xbf16, #tpu.memory_space<vmem>>, vector<1x64x64xbf16>
    %38 = vector.shape_cast %37 : vector<1x64x64xbf16> to vector<64x64xbf16>
    %cst_15 = arith.constant dense<0.000000e+00> : vector<16x64xf32>
    %39 = tpu.matmul %36, %38, %cst_15 {dimension_numbers = #tpu.dot_dimension_numbers<[1], [0], [0], [1], [0, 0, 1, 1], [], []>} : vector<16x64xbf16>, vector<64x64xbf16>, vector<16x64xf32> -> vector<16x64xf32>
    %40 = arith.addf %2, %39 : vector<16x64xf32>
    %41 = vector.extract_strided_slice %3 {offsets = [4, 0], sizes = [1, 64], strides = [1, 1]} : vector<6x64xf32> to vector<1x64xf32>
    %42 = vector.broadcast %41 : vector<1x64xf32> to vector<16x64xf32>
    %43 = arith.addf %40, %42 : vector<16x64xf32>
    %cst_16 = arith.constant dense<0.000000e+00> : vector<16xf32>
    %44 = vector.multi_reduction <add>, %43, %cst_16 [1] : vector<16x64xf32> to vector<16xf32>
    %45 = vector.shape_cast %44 : vector<16xf32> to vector<16x1xf32>
    %46 = arith.mulf %43, %43 : vector<16x64xf32>
    %cst_17 = arith.constant dense<0.000000e+00> : vector<16xf32>
    %47 = vector.multi_reduction <add>, %46, %cst_17 [1] : vector<16x64xf32> to vector<16xf32>
    %48 = vector.shape_cast %47 : vector<16xf32> to vector<16x1xf32>
    %cst_18 = arith.constant 1.562500e-02 : f32
    %49 = vector.broadcast %cst_18 : f32 to vector<16x1xf32>
    %50 = arith.mulf %45, %49 : vector<16x1xf32>
    %cst_19 = arith.constant 1.562500e-02 : f32
    %51 = vector.broadcast %cst_19 : f32 to vector<16x1xf32>
    %52 = arith.mulf %48, %51 : vector<16x1xf32>
    %53 = arith.mulf %50, %50 : vector<16x1xf32>
    %54 = arith.subf %52, %53 : vector<16x1xf32>
    %cst_20 = arith.constant 0.000000e+00 : f32
    %55 = vector.broadcast %cst_20 : f32 to vector<16x1xf32>
    %56 = arith.maximumf %54, %55 : vector<16x1xf32>
    %57 = vector.broadcast %50 : vector<16x1xf32> to vector<16x64xf32>
    %58 = arith.subf %43, %57 : vector<16x64xf32>
    %cst_21 = arith.constant 9.99999974E-6 : f32
    %59 = vector.broadcast %cst_21 : f32 to vector<16x1xf32>
    %60 = arith.addf %56, %59 : vector<16x1xf32>
    %61 = math.rsqrt %60 : vector<16x1xf32>
    %62 = vector.broadcast %61 : vector<16x1xf32> to vector<16x64xf32>
    %63 = arith.mulf %58, %62 : vector<16x64xf32>
    %64 = vector.extract_strided_slice %3 {offsets = [1, 0], sizes = [1, 64], strides = [1, 1]} : vector<6x64xf32> to vector<1x64xf32>
    %65 = vector.broadcast %64 : vector<1x64xf32> to vector<16x64xf32>
    %66 = arith.mulf %63, %65 : vector<16x64xf32>
    %67 = vector.extract_strided_slice %3 {offsets = [3, 0], sizes = [1, 64], strides = [1, 1]} : vector<6x64xf32> to vector<1x64xf32>
    %68 = vector.broadcast %67 : vector<1x64xf32> to vector<16x64xf32>
    %69 = arith.addf %66, %68 : vector<16x64xf32>
    %70 = arith.negf %69 : vector<16x64xf32>
    %71 = math.exp %70 : vector<16x64xf32>
    %cst_22 = arith.constant 1.000000e+00 : f32
    %72 = vector.broadcast %cst_22 : f32 to vector<16x64xf32>
    %73 = arith.addf %72, %71 : vector<16x64xf32>
    %74 = arith.divf %72, %73 : vector<16x64xf32>
    %75 = arith.mulf %69, %74 : vector<16x64xf32>
    %76 = arith.truncf %75 : vector<16x64xf32> to vector<16x64xbf16>
    %c1 = arith.constant 1 : index
    %c0_23 = arith.constant 0 : index
    %c0_24 = arith.constant 0 : index
    %77 = vector.load %arg3[%c1, %c0_23, %c0_24] : memref<2x64x64xbf16, #tpu.memory_space<vmem>>, vector<1x64x64xbf16>
    %78 = vector.shape_cast %77 : vector<1x64x64xbf16> to vector<64x64xbf16>
    %cst_25 = arith.constant dense<0.000000e+00> : vector<16x64xf32>
    %79 = tpu.matmul %76, %78, %cst_25 {dimension_numbers = #tpu.dot_dimension_numbers<[1], [0], [0], [1], [0, 0, 1, 1], [], []>} : vector<16x64xbf16>, vector<64x64xbf16>, vector<16x64xf32> -> vector<16x64xf32>
    %80 = arith.addf %43, %79 : vector<16x64xf32>
    %81 = vector.extract_strided_slice %3 {offsets = [5, 0], sizes = [1, 64], strides = [1, 1]} : vector<6x64xf32> to vector<1x64xf32>
    %82 = vector.broadcast %81 : vector<1x64xf32> to vector<16x64xf32>
    %83 = arith.addf %80, %82 : vector<16x64xf32>
    %84 = arith.negf %83 : vector<16x64xf32>
    %85 = math.exp %84 : vector<16x64xf32>
    %cst_26 = arith.constant 1.000000e+00 : f32
    %86 = vector.broadcast %cst_26 : f32 to vector<16x64xf32>
    %87 = arith.addf %86, %85 : vector<16x64xf32>
    %88 = arith.divf %86, %87 : vector<16x64xf32>
    %89 = arith.mulf %83, %88 : vector<16x64xf32>
    %90 = arith.truncf %89 : vector<16x64xf32> to vector<16x64xbf16>
    %c0_27 = arith.constant 0 : index
    %c0_28 = arith.constant 0 : index
    %91 = vector.load %arg5[%c0_27, %c0_28] : memref<64x12xbf16, #tpu.memory_space<vmem>>, vector<64x12xbf16>
    %cst_29 = arith.constant dense<0.000000e+00> : vector<16x12xf32>
    %92 = tpu.matmul %90, %91, %cst_29 {dimension_numbers = #tpu.dot_dimension_numbers<[1], [0], [0], [1], [0, 0, 1, 1], [], []>} : vector<16x64xbf16>, vector<64x12xbf16>, vector<16x12xf32> -> vector<16x12xf32>
    %c0_30 = arith.constant 0 : index
    %c0_31 = arith.constant 0 : index
    %93 = vector.load %arg6[%c0_30, %c0_31] : memref<1x12xf32, #tpu.memory_space<vmem>>, vector<1x12xf32>
    %94 = vector.broadcast %93 : vector<1x12xf32> to vector<16x12xf32>
    %95 = arith.addf %92, %94 : vector<16x12xf32>
    %c0_32 = arith.constant 0 : index
    %c0_33 = arith.constant 0 : index
    %96 = vector.load %arg7[%c0_32, %c0_33] : memref<16x12xf32, #tpu.memory_space<vmem>>, vector<16x12xf32>
    tpu.vector_store %arg7[%c0_32, %c0_33], %95 {strides = array<i32>} : memref<16x12xf32, #tpu.memory_space<vmem>>, vector<16x12xf32>,
    return
  }
  func.func @transform_0(%arg0: i32) -> (i32, i32) {
    %c0_i32 = arith.constant 0 : i32
    %c0_i32_0 = arith.constant 0 : i32
    return %arg0, %c0_i32 : i32, i32
  }
  func.func @transform_1(%arg0: i32) -> (i32, i32) {
    %c0_i32 = arith.constant 0 : i32
    %c0_i32_0 = arith.constant 0 : i32
    %c0_i32_1 = arith.constant 0 : i32
    return %c0_i32, %c0_i32_0 : i32, i32
  }
  func.func @transform_2(%arg0: i32) -> (i32, i32, i32) {
    %c0_i32 = arith.constant 0 : i32
    %c0_i32_0 = arith.constant 0 : i32
    %c0_i32_1 = arith.constant 0 : i32
    %c0_i32_2 = arith.constant 0 : i32
    return %c0_i32, %c0_i32_0, %c0_i32_1 : i32, i32, i32
  }
  func.func @transform_3(%arg0: i32) -> (i32, i32) {
    %c0_i32 = arith.constant 0 : i32
    %c0_i32_0 = arith.constant 0 : i32
    %c0_i32_1 = arith.constant 0 : i32
    return %c0_i32, %c0_i32_0 : i32, i32
  }
  func.func @transform_4(%arg0: i32) -> (i32, i32) {
    %c0_i32 = arith.constant 0 : i32
    %c0_i32_0 = arith.constant 0 : i32
    %c0_i32_1 = arith.constant 0 : i32
    return %c0_i32, %c0_i32_0 : i32, i32
  }
  func.func @transform_5(%arg0: i32) -> (i32, i32) {
    %c0_i32 = arith.constant 0 : i32
    %c0_i32_0 = arith.constant 0 : i32
    %c0_i32_1 = arith.constant 0 : i32
    return %c0_i32, %c0_i32_0 : i32, i32
  }
  func.func @transform_6(%arg0: i32) -> (i32, i32) {
    %c0_i32 = arith.constant 0 : i32
    %c0_i32_0 = arith.constant 0 : i32
    return %arg0, %c0_i32 : i32, i32
  }
}

</mosaic_0001>

<llo_original>
// kernel: denoiser_forward.1
$region0: #{denoiser_forward.1}
  #allocation0 [shape = 'u32[]', space=smem, size = 0x4, offset = 0x4, fixed_abs, tag = 'smem constant byte address 0x4 - core index']
  #allocation1 [shape = 'u32[144,128]{1,0:T(1,128)}', space=vmem, size = 0x12000, scoped, tag = 'internal scratch']
  %s0 = inlined_call_operand.vmem [shape: bf16[24,42], index: 0, kind: input, shape index: {}]
  %s1 = inlined_call_operand.vmem [shape: bf16[42,64], index: 1, kind: input, shape index: {}]
  %s2 = inlined_call_operand.vmem [shape: bf16[2,64,64], index: 2, kind: input, shape index: {}]
  %s3 = inlined_call_operand.vmem [shape: f32[6,64], index: 3, kind: input, shape index: {}]
  %s4 = inlined_call_operand.vmem [shape: bf16[64,12], index: 4, kind: input, shape index: {}]
  %s5 = inlined_call_operand.vmem [shape: f32[1,12], index: 5, kind: input, shape index: {}]
  %s6 = inlined_call_operand.hbm [shape: f32[24,12], index: 6, kind: output, shape index: {}]
  %s7 = sld [smem:[#allocation0]]
  $region57: #{denoiser_forward.1} parent=0
    _
  %s9 = ssub.s32 1, %s7
  %s10 = scalar_select 0, %s9, %s7
  $region1: #{denoiser_forward.1} parent=0
    #allocation2 [shape = 'u8[16384]{0}', space=vmem, size = 0x4000, scoped, tag = 'output window, operand 0']
    #allocation3 [shape = 's32[2]{0}', space=sflag, size = 0x8, scoped, tag = 'scoped memory for denoiser_forward.1']
    %11 = vsyncpa [#allocation3], 0
    %s12 = scalar_lea.sflag [#allocation3], 1
    %13 = vsyncpa %s12, 0
    loop: start=0, step=1, limit=4
    $region2: #{denoiser_forward.1} parent=1 // loop_pre_header
      _
    $region3: #{denoiser_forward.1} parent=1 // loop_header
      %s15 = sphi 0, %s19
      %p16 = scmp.ge.s32.totalorder %s15, 4
      %s25 = sphi 0, %s27
      %s28 = sphi 0, %s25
      %s29 = sphi 0, %s28
      %s45 = sphi 0, %s29
      %s49 = sphi 0, %s49
      %s51 = sphi 0, %s49
      %s52 = sphi 0, %s51
      %s66 = sphi 0, %s52
      %s70 = sphi 0, %s70
      %s72 = sphi 0, %s70
      %s73 = sphi 0, %s72
      %s87 = sphi 0, %s73
      %s91 = sphi 0, %s91
      %s93 = sphi 0, %s91
      %s94 = sphi 0, %s93
      %s108 = sphi 0, %s94
      %s112 = sphi 0, %s112
      %s114 = sphi 0, %s112
      %s115 = sphi 0, %s114
      %s129 = sphi 0, %s115
      %s133 = sphi 0, %s133
      %s135 = sphi 0, %s133
      %s136 = sphi 0, %s135
      %s150 = sphi 0, %s136
      %s156 = sphi 0, %s158
      %s159 = sphi 0, %s156
      %s160 = sphi 0, %s159
      %s176 = sphi 0, %s160
    $region4: #{denoiser_forward.1} parent=1 // loop_header_branch
      %18 = sbr.rel (%p16) target = $region8
    $region5: #{denoiser_forward.1} parent=1 // loop_body
      %s20 = ssub.s32 %s15, 1
      %s21 = ssub.s32 %s15, 2
      %s22 = sadd.s32 %s15, 1
      %s23 = ssub.s32 %s15, %s22
      %p24 = scmp.eq.s32.totalorder %s23, 0
      %s26 = sadd.s32 %s25, 1
      %s27 = scalar_select %p24, %s25, %s26
      %p30 = pneg %p24
      %p31 = scmp.eq.s32.totalorder %s15, 1
      %p32 = por %p30, %p31
      %p33 = scmp.ne.s32.totalorder %s25, %s28
      %p34 = scmp.eq.s32.totalorder %s15, 0
      %p35 = por %p33, %p34
      %p36 = scmp.ne.s32.totalorder %s25, %s28
      %p37 = scmp.eq.s32.totalorder %s20, 1
      %p38 = por %p36, %p37
      %p39 = scmp.ne.s32.totalorder %s28, %s29
      %p40 = scmp.eq.s32.totalorder %s20, 0
      %p41 = por %p39, %p40
      %p42 = scmp.ne.s32.totalorder %s28, %s29
      %p43 = scmp.eq.s32.totalorder %s21, 1
      %p44 = por %p42, %p43
      %p46 = scmp.ne.s32.totalorder %s29, %s45
      %p47 = scmp.eq.s32.totalorder %s21, 0
      %p48 = por %p46, %p47
      %s50 = sadd.s32 %s49, 1
      %p53 = scmp.eq.s32.totalorder %s15, 1
      %p54 = scmp.ne.s32.totalorder %s49, %s51
      %p55 = scmp.eq.s32.totalorder %s15, 0
      %p56 = por %p54, %p55
      %p57 = scmp.ne.s32.totalorder %s49, %s51
      %p58 = scmp.eq.s32.totalorder %s20, 1
      %p59 = por %p57, %p58
      %p60 = scmp.ne.s32.totalorder %s51, %s52
      %p61 = scmp.eq.s32.totalorder %s20, 0
      %p62 = por %p60, %p61
      %p63 = scmp.ne.s32.totalorder %s51, %s52
      %p64 = scmp.eq.s32.totalorder %s21, 1
      %p65 = por %p63, %p64
      %p67 = scmp.ne.s32.totalorder %s52, %s66
      %p68 = scmp.eq.s32.totalorder %s21, 0
      %p69 = por %p67, %p68
      %s71 = sadd.s32 %s70, 1
      %p74 = scmp.eq.s32.totalorder %s15, 1
      %p75 = scmp.ne.s32.totalorder %s70, %s72
      %p76 = scmp.eq.s32.totalorder %s15, 0
      %p77 = por %p75, %p76
      %p78 = scmp.ne.s32.totalorder %s70, %s72
      %p79 = scmp.eq.s32.totalorder %s20, 1
      %p80 = por %p78, %p79
      %p81 = scmp.ne.s32.totalorder %s72, %s73
      %p82 = scmp.eq.s32.totalorder %s20, 0
      %p83 = por %p81, %p82
      %p84 = scmp.ne.s32.totalorder %s72, %s73
      %p85 = scmp.eq.s32.totalorder %s21, 1
      %p86 = por %p84, %p85
      %p88 = scmp.ne.s32.totalorder %s73, %s87
      %p89 = scmp.eq.s32.totalorder %s21, 0
      %p90 = por %p88, %p89
      %s92 = sadd.s32 %s91, 1
      %p95 = scmp.eq.s32.totalorder %s15, 1
      %p96 = scmp.ne.s32.totalorder %s91, %s93
      %p97 = scmp.eq.s32.totalorder %s15, 0
      %p98 = por %p96, %p97
      %p99 = scmp.ne.s32.totalorder %s91, %s93
      %p100 = scmp.eq.s32.totalorder %s20, 1
      %p101 = por %p99, %p100
      %p102 = scmp.ne.s32.totalorder %s93, %s94
      %p103 = scmp.eq.s32.totalorder %s20, 0
      %p104 = por %p102, %p103
      %p105 = scmp.ne.s32.totalorder %s93, %s94
      %p106 = scmp.eq.s32.totalorder %s21, 1
      %p107 = por %p105, %p106
      %p109 = scmp.ne.s32.totalorder %s94, %s108
      %p110 = scmp.eq.s32.totalorder %s21, 0
      %p111 = por %p109, %p110
      %s113 = sadd.s32 %s112, 1
      %p116 = scmp.eq.s32.totalorder %s15, 1
      %p117 = scmp.ne.s32.totalorder %s112, %s114
      %p118 = scmp.eq.s32.totalorder %s15, 0
      %p119 = por %p117, %p118
      %p120 = scmp.ne.s32.totalorder %s112, %s114
      %p121 = scmp.eq.s32.totalorder %s20, 1
      %p122 = por %p120, %p121
      %p123 = scmp.ne.s32.totalorder %s114, %s115
      %p124 = scmp.eq.s32.totalorder %s20, 0
      %p125 = por %p123, %p124
      %p126 = scmp.ne.s32.totalorder %s114, %s115
      %p127 = scmp.eq.s32.totalorder %s21, 1
      %p128 = por %p126, %p127
      %p130 = scmp.ne.s32.totalorder %s115, %s129
      %p131 = scmp.eq.s32.totalorder %s21, 0
      %p132 = por %p130, %p131
      %s134 = sadd.s32 %s133, 1
      %p137 = scmp.eq.s32.totalorder %s15, 1
      %p138 = scmp.ne.s32.totalorder %s133, %s135
      %p139 = scmp.eq.s32.totalorder %s15, 0
      %p140 = por %p138, %p139
      %p141 = scmp.ne.s32.totalorder %s133, %s135
      %p142 = scmp.eq.s32.totalorder %s20, 1
      %p143 = por %p141, %p142
      %p144 = scmp.ne.s32.totalorder %s135, %s136
      %p145 = scmp.eq.s32.totalorder %s20, 0
      %p146 = por %p144, %p145
      %p147 = scmp.ne.s32.totalorder %s135, %s136
      %p148 = scmp.eq.s32.totalorder %s21, 1
      %p149 = por %p147, %p148
      %p151 = scmp.ne.s32.totalorder %s136, %s150
      %p152 = scmp.eq.s32.totalorder %s21, 0
      %p153 = por %p151, %p152
      %s154 = ssub.s32 %s15, %s22
      %p155 = scmp.eq.s32.totalorder %s154, 0
      %s157 = sadd.s32 %s156, 1
      %s158 = scalar_select %p155, %s156, %s157
      %p161 = pneg %p155
      %p162 = scmp.eq.s32.totalorder %s15, 1
      %p163 = por %p161, %p162
      %p164 = scmp.ne.s32.totalorder %s156, %s159
      %p165 = scmp.eq.s32.totalorder %s15, 0
      %p166 = por %p164, %p165
      %p167 = scmp.ne.s32.totalorder %s156, %s159
      %p168 = scmp.eq.s32.totalorder %s20, 1
      %p169 = por %p167, %p168
      %p170 = scmp.ne.s32.totalorder %s159, %s160
      %p171 = scmp.eq.s32.totalorder %s20, 0
      %p172 = por %p170, %p171
      %p173 = scmp.ne.s32.totalorder %s159, %s160
      %p174 = scmp.eq.s32.totalorder %s21, 1
      %p175 = por %p173, %p174
      %p177 = scmp.ne.s32.totalorder %s160, %s176
      %p178 = scmp.eq.s32.totalorder %s21, 0
      %p179 = por %p177, %p178
      %p180 = scmp.le.s32.totalorder 1, %s15
      %p181 = scmp.lt.s32.totalorder %s15, 3
      %p182 = pnand %p180, %p181
      %p183 = pneg %p182
      // Predicated region
      $region9: #{denoiser_forward.1} parent=5 // pred_check
        _
      $region10: #{denoiser_forward.1} parent=5 // pred_check_branch
        %185 = sbr.rel (%p182) target = $region12
      $region11: #{denoiser_forward.1} parent=5 // pred_region
        %s186 = ssub.s32 %s15, 1
        // Predicated region
        $region13: #{denoiser_forward.1} parent=11 // pred_check
          %p187 = pneg %p62
        $region14: #{denoiser_forward.1} parent=11 // pred_check_branch
          %189 = sbr.rel (%p187) target = $region16
        $region15: #{denoiser_forward.1} parent=11 // pred_region
          _
        $region16: #{denoiser_forward.1} parent=11 // pred_fallthru
          _
        // Predicated region
        $region17: #{denoiser_forward.1} parent=11 // pred_check
          %p190 = pneg %p83
        $region18: #{denoiser_forward.1} parent=11 // pred_check_branch
          %192 = sbr.rel (%p190) target = $region20
        $region19: #{denoiser_forward.1} parent=11 // pred_region
          _
        $region20: #{denoiser_forward.1} parent=11 // pred_fallthru
          _
        // Predicated region
        $region21: #{denoiser_forward.1} parent=11 // pred_check
          %p193 = pneg %p104
        $region22: #{denoiser_forward.1} parent=11 // pred_check_branch
          %195 = sbr.rel (%p193) target = $region24
        $region23: #{denoiser_forward.1} parent=11 // pred_region
          _
        $region24: #{denoiser_forward.1} parent=11 // pred_fallthru
          _
        // Predicated region
        $region25: #{denoiser_forward.1} parent=11 // pred_check
          %p196 = pneg %p125
        $region26: #{denoiser_forward.1} parent=11 // pred_check_branch
          %198 = sbr.rel (%p196) target = $region28
        $region27: #{denoiser_forward.1} parent=11 // pred_region
          _
        $region28: #{denoiser_forward.1} parent=11 // pred_fallthru
          _
        // Predicated region
        $region29: #{denoiser_forward.1} parent=11 // pred_check
          %p199 = pneg %p146
        $region30: #{denoiser_forward.1} parent=11 // pred_check_branch
          %201 = sbr.rel (%p199) target = $region32
        $region31: #{denoiser_forward.1} parent=11 // pred_region
          _
        $region32: #{denoiser_forward.1} parent=11 // pred_fallthru
          _
      $region12: #{denoiser_forward.1} parent=5 // pred_fallthru
        _
      %p202 = scmp.lt.s32.totalorder %s15, 2
      // Predicated region
      $region33: #{denoiser_forward.1} parent=5 // pred_check
        %p203 = pneg %p202
      $region34: #{denoiser_forward.1} parent=5 // pred_check_branch
        %205 = sbr.rel (%p203) target = $region36
      $region35: #{denoiser_forward.1} parent=5 // pred_region
        // Predicated region
        $region37: #{denoiser_forward.1} parent=35 // pred_check
          %p206 = pneg %p35
        $region38: #{denoiser_forward.1} parent=35 // pred_check_branch
          %208 = sbr.rel (%p206) target = $region40
        $region39: #{denoiser_forward.1} parent=35 // pred_region
          %s209 = smul.u32 2, %s15
          %s210 = ssub.s32 3, %s209
          %p211 = scmp.lt.s32.totalorder %s210, 2
          %s212 = scalar_select %p211, %s210, 2
          %s213 = smul.u32 64, %s212
          %p214 = scmp.lt.s32.totalorder %s209, 2
          %s215 = scalar_select %p214, %s209, 2
          %s216 = smul.addr %s215, 4
          %s217 = scalar_lea.vmem %s0, %s216
          %s218 = smul.u32 2, %s15
          %s219 = ssub.s32 3, %s218
          %p220 = scmp.lt.s32.totalorder %s219, 2
          %s221 = scalar_select %p220, %s219, 2
          %s222 = smul.u32 64, %s221
        $region40: #{denoiser_forward.1} parent=35 // pred_fallthru
          _
      $region36: #{denoiser_forward.1} parent=5 // pred_fallthru
        _
      %p223 = scmp.le.s32.totalorder 1, %s15
      %p224 = scmp.lt.s32.totalorder %s15, 3
      %p225 = pnand %p223, %p224
      %p226 = pneg %p225
      // Predicated region
      $region41: #{denoiser_forward.1} parent=5 // pred_check
        _
      $region42: #{denoiser_forward.1} parent=5 // pred_check_branch
        %228 = sbr.rel (%p225) target = $region44
      $region43: #{denoiser_forward.1} parent=5 // pred_region
        %s229 = ssub.s32 %s15, 1
        %s230 = smul.u32 2, %s20
        %s231 = ssub.s32 3, %s230
        %p232 = scmp.lt.s32.totalorder %s231, 2
        %s233 = scalar_select %p232, %s231, 2
        %s234 = smul.u32 64, %s233
        %p235 = scmp.lt.s32.totalorder %s230, 2
        %s236 = scalar_select %p235, %s230, 2
        %s237 = smul.addr %s236, 4
        %s238 = scalar_lea.vmem %s0, %s237
        %p239 = pneg %p41
        %p240 = pneg %p38
        %p241 = pneg %p62
        %p242 = pneg %p59
        %p243 = pneg %p83
        %p244 = pneg %p80
        %p245 = pneg %p104
        %p246 = pneg %p101
        %p247 = pneg %p125
        %p248 = pneg %p122
        %p249 = pneg %p146
        %p250 = pneg %p143
        %p251 = pneg %p172
        %p252 = pneg %p169
        %s253 = sand.u32 %s159, 1
        %s254 = scalar_lea.sflag [#allocation3], %s253
        %s255 = sand.u32 %s159, 1
        %s256 = smul.addr %s255, 16
        %s257 = scalar_lea.vmem [#allocation2], %s256
        %s258 = smul.u32 2, %s20
        %s259 = ssub.s32 3, %s258
        %p260 = scmp.lt.s32.totalorder %s259, 2
        %s261 = scalar_select %p260, %s259, 2
        %s262 = smul.u32 64, %s261
        %p263 = scmp.lt.s32.totalorder %s258, 2
        %s264 = scalar_select %p263, %s258, 2
        %s265 = smul.addr %s264, 4
        %s266 = scalar_lea.vmem %s0, %s265
        %s267 = smul.u32 2, %s20
        %s268 = ssub.s32 3, %s267
        %p269 = scmp.lt.s32.totalorder %s268, 2
        %s270 = scalar_select %p269, %s268, 2
        %s271 = smul.u32 64, %s270
        %s272 = smul.u32 2, %s20
        %s273 = ssub.s32 3, %s272
        %p274 = scmp.lt.s32.totalorder %s273, 2
        %s275 = scalar_select %p274, %s273, 2
        %s276 = smul.u32 128, %s275
        %v278 = vld [vmem:[%s266] sm:$0xf]
        %v279 = vld [vmem:[%s266 + $0x4] sm:$0xf]
        %v280 = vld [vmem:[%s1] sm:$0xf]
        %v281 = vld [vmem:[%s1 + $0x4] sm:$0xf]
        %v282 = vld [vmem:[%s1 + $0x8] sm:$0xf]
        %v283 = vld [vmem:[%s1 + $0xc] sm:$0xf]
        %v284 = vld [vmem:[%s1 + $0x10] sm:$0xf]
        %v285 = vld [vmem:[%s1 + $0x14] sm:$0x1]
        %v288 = vunpack.c.l.b16 %v278
        %v289 = vunpack.c.l.b16 %v279
        %v290 = vpack.c.b16 %v289, %v288
        %v297 = vunpack.c.l.b16 %v280
        %v298 = vunpack.c.l.b16 %v281
        %v299 = vunpack.c.l.b16 %v282
        %v300 = vunpack.c.l.b16 %v283
        %v301 = vunpack.c.l.b16 %v284
        %v302 = vunpack.c.l.b16 %v285
        %v303 = vpack.c.b16 %v298, %v297
        %v304 = vpack.c.b16 %v300, %v299
        %v305 = vpack.c.b16 %v302, %v301
        %vm308 = vcmask 343040
        %v310 = vsel %vm308, %v290, 0
        %vm312 = vcmask 1044480
        %v314 = vsel %vm312, %v305, 0
        %316 = vmatprep.subr.bf16.mxu0 0
        %317 = vmatpush1.bf16.msra.mxu0 0
        %318 = vmatprep.subr.bf16.mxu0 0
        %319 = vmatpush1.bf16.msra.mxu0 0
        %320 = vmatprep.subr.bf16.mxu0 0
        %321 = vmatpush1.bf16.msra.mxu0 0
        %322 = vmatprep.subr.bf16.mxu0 0
        %323 = vmatpush1.bf16.msra.mxu0 0
        %324 = vmatprep.subr.bf16.mxu0 0
        %325 = vmatpush1.bf16.msra.mxu0 0
        %326 = vmatprep.subr.bf16.mxu0 0
        %327 = vmatpush1.bf16.msra.mxu0 %v314
        %328 = vmatprep.subr.bf16.mxu0 0
        %329 = vmatpush1.bf16.msra.mxu0 %v304
        %330 = vmatprep.subr.bf16.mxu0 0
        %331 = vmatpush1.bf16.msra.mxu0 %v303
        %332 = vmatprep.subr.bf16.mxu0 0
        %333 = vmatpush2.bf16.msra.mxu0 0
        %334 = vmatprep.subr.bf16.mxu0 0
        %335 = vmatpush2.bf16.msra.mxu0 0
        %336 = vmatprep.subr.bf16.mxu0 0
        %337 = vmatpush2.bf16.msra.mxu0 0
        %338 = vmatprep.subr.bf16.mxu0 0
        %339 = vmatpush2.bf16.msra.mxu0 0
        %340 = vmatprep.subr.bf16.mxu0 0
        %341 = vmatpush2.bf16.msra.mxu0 0
        %342 = vmatprep.subr.bf16.mxu0 0
        %343 = vmatpush2.bf16.msra.mxu0 0
        %344 = vmatprep.subr.bf16.mxu0 0
        %345 = vmatpush2.bf16.msra.mxu0 0
        %346 = vmatprep.subr.bf16.mxu0 0
        %347 = vmatpush2.bf16.msra.mxu0 0
        %348 = vmatprep.mubr.bf16.mxu0 0
        %349 = vmatmul.mubr.bf16.gmra.mxu0 %v310
        %v350 = vpop.f32.mrf.mxu0
        %v351 = vadd.f32 0.0, %v350
        %v352 = vpop.f32.mrf.mxu0
        %v353 = vpop.f32.mrf.mxu0
        %v354 = vadd.f32 0.0, %v353
        %v355 = vpop.f32.mrf.mxu0
        %356 = vdwg.mxu0
        %v357 = vld [vmem:[%s3] sm:$0x3f]
        %vm358 = vcmask 523264
        %v359 = vsel %vm358, %v351, 0.0
        %360 = vadd.xlane.f32.xlu0 %v359
        %v361 = vpop.xlane.xlu0 %360
        %v362 = vsel %vm358, %v354, 0.0
        %363 = vadd.xlane.f32.xlu0 %v362
        %v364 = vpop.xlane.xlu0 %363
        %v365 = vmul.f32 %v351, %v351
        %v366 = vmul.f32 %v354, %v354
        %v367 = vsel %vm358, %v365, 0.0
        %368 = vadd.xlane.f32.xlu0 %v367
        %v369 = vpop.xlane.xlu0 %368
        %v370 = vsel %vm358, %v366, 0.0
        %371 = vadd.xlane.f32.xlu0 %v370
        %v372 = vpop.xlane.xlu0 %371
        %v373 = vmul.f32 %v361, 0.015625
        %v374 = vmul.f32 %v364, 0.015625
        %v375 = vmul.f32 %v369, 0.015625
        %v376 = vmul.f32 %v372, 0.015625
        %v377 = vmul.f32 %v373, %v373
        %v378 = vmul.f32 %v374, %v374
        %v379 = vsub.f32 %v375, %v377
        %v380 = vsub.f32 %v376, %v378
        %v381 = vmax.f32 %v379, 0.0
        %v382 = vmax.f32 %v380, 0.0
        %v383 = vsub.f32 %v351, %v373
        %v384 = vsub.f32 %v354, %v374
        %v385 = vadd.f32 %v381, 1e-05
        %v386 = vadd.f32 %v382, 1e-05
        %v387 = vrsqrt.pop %v385
        %v388 = vrsqrt.pop %v386
        %v389 = vmul.f32 %v383, %v387
        %v390 = vmul.f32 %v384, %v388
        %v391 = vlaneseq
        %v392 = vshrl.u32 %v391, 7
        %v393 = vsub.s32 0, %v392
        %v394 = vrot.slane %v357, %v393
        %v395 = vmul.f32 %v389, %v394
        %v396 = vmul.f32 %v390, %v394
        %v397 = vlaneseq
        %v398 = vshrl.u32 %v397, 7
        %v399 = vsub.s32 2, %v398
        %v400 = vrot.slane %v357, %v399
        %v401 = vadd.f32 %v395, %v400
        %v402 = vadd.f32 %v396, %v400
        %v403 = vxor.u32 %v401, 2147483648
        %v404 = vxor.u32 %v402, 2147483648
        %v405 = vmul.f32 %v403, 1.442695
        %v406 = vpow.pop %v405
        %v407 = vmul.f32 %v404, 1.442695
        %v408 = vpow.pop %v407
        %v409 = vadd.f32 %v406, 1.0
        %v410 = vadd.f32 %v408, 1.0
        %v411 = vrcp.pop %v409
        %v412 = vmul.f32 1.0, %v411
        %v413 = vrcp.pop %v410
        %v414 = vmul.f32 1.0, %v413
        %v415 = vmul.f32 %v401, %v412
        %v416 = vmul.f32 %v402, %v414
        %v417 = vpack.c.bf16 %v416, %v415
        %v418 = vld [vmem:[%s2] sm:$0xf]
        %v419 = vld [vmem:[%s2 + $0x4] sm:$0xf]
        %v420 = vld [vmem:[%s2 + $0x8] sm:$0xf]
        %v421 = vld [vmem:[%s2 + $0xc] sm:$0xf]
        %v422 = vld [vmem:[%s2 + $0x10] sm:$0xf]
        %v423 = vld [vmem:[%s2 + $0x14] sm:$0xf]
        %v424 = vld [vmem:[%s2 + $0x18] sm:$0xf]
        %v425 = vld [vmem:[%s2 + $0x1c] sm:$0xf]
        %v434 = vunpack.c.l.b16 %v418
        %v435 = vunpack.c.l.b16 %v419
        %v436 = vunpack.c.l.b16 %v420
        %v437 = vunpack.c.l.b16 %v421
        %v438 = vunpack.c.l.b16 %v422
        %v439 = vunpack.c.l.b16 %v423
        %v440 = vunpack.c.l.b16 %v424
        %v441 = vunpack.c.l.b16 %v425
        %v442 = vpack.c.b16 %v435, %v434
        %v443 = vpack.c.b16 %v437, %v436
        %v444 = vpack.c.b16 %v439, %v438
        %v445 = vpack.c.b16 %v441, %v440
        %v451 = vsel %vm358, %v417, 0
        %453 = vmatprep.subr.bf16.mxu0 0
        %454 = vmatpush1.bf16.msra.mxu0 0
        %455 = vmatprep.subr.bf16.mxu0 0
        %456 = vmatpush1.bf16.msra.mxu0 0
        %457 = vmatprep.subr.bf16.mxu0 0
        %458 = vmatpush1.bf16.msra.mxu0 0
        %459 = vmatprep.subr.bf16.mxu0 0
        %460 = vmatpush1.bf16.msra.mxu0 0
        %461 = vmatprep.subr.bf16.mxu0 0
        %462 = vmatpush1.bf16.msra.mxu0 %v445
        %463 = vmatprep.subr.bf16.mxu0 0
        %464 = vmatpush1.bf16.msra.mxu0 %v444
        %465 = vmatprep.subr.bf16.mxu0 0
        %466 = vmatpush1.bf16.msra.mxu0 %v443
        %467 = vmatprep.subr.bf16.mxu0 0
        %468 = vmatpush1.bf16.msra.mxu0 %v442
        %469 = vmatprep.subr.bf16.mxu0 0
        %470 = vmatpush2.bf16.msra.mxu0 0
        %471 = vmatprep.subr.bf16.mxu0 0
        %472 = vmatpush2.bf16.msra.mxu0 0
        %473 = vmatprep.subr.bf16.mxu0 0
        %474 = vmatpush2.bf16.msra.mxu0 0
        %475 = vmatprep.subr.bf16.mxu0 0
        %476 = vmatpush2.bf16.msra.mxu0 0
        %477 = vmatprep.subr.bf16.mxu0 0
        %478 = vmatpush2.bf16.msra.mxu0 0
        %479 = vmatprep.subr.bf16.mxu0 0
        %480 = vmatpush2.bf16.msra.mxu0 0
        %481 = vmatprep.subr.bf16.mxu0 0
        %482 = vmatpush2.bf16.msra.mxu0 0
        %483 = vmatprep.subr.bf16.mxu0 0
        %484 = vmatpush2.bf16.msra.mxu0 0
        %485 = vmatprep.mubr.bf16.mxu0 0
        %486 = vmatmul.mubr.bf16.gmra.mxu0 %v451
        %v487 = vpop.f32.mrf.mxu0
        %v488 = vadd.f32 0.0, %v487
        %v489 = vpop.f32.mrf.mxu0
        %v490 = vpop.f32.mrf.mxu0
        %v491 = vadd.f32 0.0, %v490
        %v492 = vpop.f32.mrf.mxu0
        %493 = vdwg.mxu0
        %v494 = vadd.f32 %v351, %v488
        %v495 = vadd.f32 %v354, %v491
        %v496 = vlaneseq
        %v497 = vshrl.u32 %v496, 7
        %v498 = vsub.s32 4, %v497
        %v499 = vrot.slane %v357, %v498
        %v500 = vadd.f32 %v494, %v499
        %v501 = vadd.f32 %v495, %v499
        %v502 = vsel %vm358, %v500, 0.0
        %503 = vadd.xlane.f32.xlu0 %v502
        %v504 = vpop.xlane.xlu0 %503
        %v505 = vsel %vm358, %v501, 0.0
        %506 = vadd.xlane.f32.xlu0 %v505
        %v507 = vpop.xlane.xlu0 %506
        %v508 = vmul.f32 %v500, %v500
        %v509 = vmul.f32 %v501, %v501
        %v510 = vsel %vm358, %v508, 0.0
        %511 = vadd.xlane.f32.xlu0 %v510
        %v512 = vpop.xlane.xlu0 %511
        %v513 = vsel %vm358, %v509, 0.0
        %514 = vadd.xlane.f32.xlu0 %v513
        %v515 = vpop.xlane.xlu0 %514
        %v516 = vmul.f32 %v504, 0.015625
        %v517 = vmul.f32 %v507, 0.015625
        %v518 = vmul.f32 %v512, 0.015625
        %v519 = vmul.f32 %v515, 0.015625
        %v520 = vmul.f32 %v516, %v516
        %v521 = vmul.f32 %v517, %v517
        %v522 = vsub.f32 %v518, %v520
        %v523 = vsub.f32 %v519, %v521
        %v524 = vmax.f32 %v522, 0.0
        %v525 = vmax.f32 %v523, 0.0
        %v526 = vsub.f32 %v500, %v516
        %v527 = vsub.f32 %v501, %v517
        %v528 = vadd.f32 %v524, 1e-05
        %v529 = vadd.f32 %v525, 1e-05
        %v530 = vrsqrt.pop %v528
        %v531 = vrsqrt.pop %v529
        %v532 = vmul.f32 %v526, %v530
        %v533 = vmul.f32 %v527, %v531
        %v534 = vlaneseq
        %v535 = vshrl.u32 %v534, 7
        %v536 = vsub.s32 1, %v535
        %v537 = vrot.slane %v357, %v536
        %v538 = vmul.f32 %v532, %v537
        %v539 = vmul.f32 %v533, %v537
        %v540 = vlaneseq
        %v541 = vshrl.u32 %v540, 7
        %v542 = vsub.s32 3, %v541
        %v543 = vrot.slane %v357, %v542
        %v544 = vadd.f32 %v538, %v543
        %v545 = vadd.f32 %v539, %v543
        %v546 = vxor.u32 %v544, 2147483648
        %v547 = vxor.u32 %v545, 2147483648
        %v548 = vmul.f32 %v546, 1.442695
        %v549 = vpow.pop %v548
        %v550 = vmul.f32 %v547, 1.442695
        %v551 = vpow.pop %v550
        %v552 = vadd.f32 %v549, 1.0
        %v553 = vadd.f32 %v551, 1.0
        %v554 = vrcp.pop %v552
        %v555 = vmul.f32 1.0, %v554
        %v556 = vrcp.pop %v553
        %v557 = vmul.f32 1.0, %v556
        %v558 = vmul.f32 %v544, %v555
        %v559 = vmul.f32 %v545, %v557
        %v560 = vpack.c.bf16 %v559, %v558
        %s561 = scalar_lea.vmem %s2, 32
        %v562 = vld [vmem:[%s561] sm:$0xf]
        %v563 = vld [vmem:[%s561 + $0x4] sm:$0xf]
        %v564 = vld [vmem:[%s561 + $0x8] sm:$0xf]
        %v565 = vld [vmem:[%s561 + $0xc] sm:$0xf]
        %v566 = vld [vmem:[%s561 + $0x10] sm:$0xf]
        %v567 = vld [vmem:[%s561 + $0x14] sm:$0xf]
        %v568 = vld [vmem:[%s561 + $0x18] sm:$0xf]
        %v569 = vld [vmem:[%s561 + $0x1c] sm:$0xf]
        %v578 = vunpack.c.l.b16 %v562
        %v579 = vunpack.c.l.b16 %v563
        %v580 = vunpack.c.l.b16 %v564
        %v581 = vunpack.c.l.b16 %v565
        %v582 = vunpack.c.l.b16 %v566
        %v583 = vunpack.c.l.b16 %v567
        %v584 = vunpack.c.l.b16 %v568
        %v585 = vunpack.c.l.b16 %v569
        %v586 = vpack.c.b16 %v579, %v578
        %v587 = vpack.c.b16 %v581, %v580
        %v588 = vpack.c.b16 %v583, %v582
        %v589 = vpack.c.b16 %v585, %v584
        %v595 = vsel %vm358, %v560, 0
        %597 = vmatprep.subr.bf16.mxu0 0
        %598 = vmatpush1.bf16.msra.mxu0 0
        %599 = vmatprep.subr.bf16.mxu0 0
        %600 = vmatpush1.bf16.msra.mxu0 0
        %601 = vmatprep.subr.bf16.mxu0 0
        %602 = vmatpush1.bf16.msra.mxu0 0
        %603 = vmatprep.subr.bf16.mxu0 0
        %604 = vmatpush1.bf16.msra.mxu0 0
        %605 = vmatprep.subr.bf16.mxu0 0
        %606 = vmatpush1.bf16.msra.mxu0 %v589
        %607 = vmatprep.subr.bf16.mxu0 0
        %608 = vmatpush1.bf16.msra.mxu0 %v588
        %609 = vmatprep.subr.bf16.mxu0 0
        %610 = vmatpush1.bf16.msra.mxu0 %v587
        %611 = vmatprep.subr.bf16.mxu0 0
        %612 = vmatpush1.bf16.msra.mxu0 %v586
        %613 = vmatprep.subr.bf16.mxu0 0
        %614 = vmatpush2.bf16.msra.mxu0 0
        %615 = vmatprep.subr.bf16.mxu0 0
        %616 = vmatpush2.bf16.msra.mxu0 0
        %617 = vmatprep.subr.bf16.mxu0 0
        %618 = vmatpush2.bf16.msra.mxu0 0
        %619 = vmatprep.subr.bf16.mxu0 0
        %620 = vmatpush2.bf16.msra.mxu0 0
        %621 = vmatprep.subr.bf16.mxu0 0
        %622 = vmatpush2.bf16.msra.mxu0 0
        %623 = vmatprep.subr.bf16.mxu0 0
        %624 = vmatpush2.bf16.msra.mxu0 0
        %625 = vmatprep.subr.bf16.mxu0 0
        %626 = vmatpush2.bf16.msra.mxu0 0
        %627 = vmatprep.subr.bf16.mxu0 0
        %628 = vmatpush2.bf16.msra.mxu0 0
        %629 = vmatprep.mubr.bf16.mxu0 0
        %630 = vmatmul.mubr.bf16.gmra.mxu0 %v595
        %v631 = vpop.f32.mrf.mxu0
        %v632 = vadd.f32 0.0, %v631
        %v633 = vpop.f32.mrf.mxu0
        %v634 = vpop.f32.mrf.mxu0
        %v635 = vadd.f32 0.0, %v634
        %v636 = vpop.f32.mrf.mxu0
        %637 = vdwg.mxu0
        %v638 = vadd.f32 %v500, %v632
        %v639 = vadd.f32 %v501, %v635
        %v640 = vlaneseq
        %v641 = vshrl.u32 %v640, 7
        %v642 = vsub.s32 5, %v641
        %v643 = vrot.slane %v357, %v642
        %v644 = vadd.f32 %v638, %v643
        %v645 = vadd.f32 %v639, %v643
        %v646 = vxor.u32 %v644, 2147483648
        %v647 = vxor.u32 %v645, 2147483648
        %v648 = vmul.f32 %v646, 1.442695
        %v649 = vpow.pop %v648
        %v650 = vmul.f32 %v647, 1.442695
        %v651 = vpow.pop %v650
        %v652 = vadd.f32 %v649, 1.0
        %v653 = vadd.f32 %v651, 1.0
        %v654 = vrcp.pop %v652
        %v655 = vmul.f32 1.0, %v654
        %v656 = vrcp.pop %v653
        %v657 = vmul.f32 1.0, %v656
        %v658 = vmul.f32 %v644, %v655
        %v659 = vmul.f32 %v645, %v657
        %v660 = vpack.c.bf16 %v659, %v658
        %v661 = vld [vmem:[%s4] sm:$0xf]
        %v662 = vld [vmem:[%s4 + $0x4] sm:$0xf]
        %v663 = vld [vmem:[%s4 + $0x8] sm:$0xf]
        %v664 = vld [vmem:[%s4 + $0xc] sm:$0xf]
        %v665 = vld [vmem:[%s4 + $0x10] sm:$0xf]
        %v666 = vld [vmem:[%s4 + $0x14] sm:$0xf]
        %v667 = vld [vmem:[%s4 + $0x18] sm:$0xf]
        %v668 = vld [vmem:[%s4 + $0x1c] sm:$0xf]
        %v669 = vld [vmem:[%s5] sm:$0x1]
        %v671 = vlaneseq
        %v672 = vshrl.u32 %v671, 7
        %v673 = vsub.s32 0, %v672
        %v674 = vrot.slane %v669, %v673
        %v684 = vunpack.c.l.b16 %v661
        %v685 = vunpack.c.l.b16 %v662
        %v686 = vunpack.c.l.b16 %v663
        %v687 = vunpack.c.l.b16 %v664
        %v688 = vunpack.c.l.b16 %v665
        %v689 = vunpack.c.l.b16 %v666
        %v690 = vunpack.c.l.b16 %v667
        %v691 = vunpack.c.l.b16 %v668
        %v692 = vpack.c.b16 %v685, %v684
        %v693 = vpack.c.b16 %v687, %v686
        %v694 = vpack.c.b16 %v689, %v688
        %v695 = vpack.c.b16 %v691, %v690
        %v701 = vsel %vm358, %v660, 0
        %703 = vmatprep.subr.bf16.mxu0 0
        %704 = vmatpush1.bf16.msra.mxu0 0
        %705 = vmatprep.subr.bf16.mxu0 0
        %706 = vmatpush1.bf16.msra.mxu0 0
        %707 = vmatprep.subr.bf16.mxu0 0
        %708 = vmatpush1.bf16.msra.mxu0 0
        %709 = vmatprep.subr.bf16.mxu0 0
        %710 = vmatpush1.bf16.msra.mxu0 0
        %711 = vmatprep.subr.bf16.mxu0 0
        %712 = vmatpush1.bf16.msra.mxu0 %v695
        %713 = vmatprep.subr.bf16.mxu0 0
        %714 = vmatpush1.bf16.msra.mxu0 %v694
        %715 = vmatprep.subr.bf16.mxu0 0
        %716 = vmatpush1.bf16.msra.mxu0 %v693
        %717 = vmatprep.subr.bf16.mxu0 0
        %718 = vmatpush1.bf16.msra.mxu0 %v692
        %719 = vmatprep.subr.bf16.mxu0 0
        %720 = vmatpush2.bf16.msra.mxu0 0
        %721 = vmatprep.subr.bf16.mxu0 0
        %722 = vmatpush2.bf16.msra.mxu0 0
        %723 = vmatprep.subr.bf16.mxu0 0
        %724 = vmatpush2.bf16.msra.mxu0 0
        %725 = vmatprep.subr.bf16.mxu0 0
        %726 = vmatpush2.bf16.msra.mxu0 0
        %727 = vmatprep.subr.bf16.mxu0 0
        %728 = vmatpush2.bf16.msra.mxu0 0
        %729 = vmatprep.subr.bf16.mxu0 0
        %730 = vmatpush2.bf16.msra.mxu0 0
        %731 = vmatprep.subr.bf16.mxu0 0
        %732 = vmatpush2.bf16.msra.mxu0 0
        %733 = vmatprep.subr.bf16.mxu0 0
        %734 = vmatpush2.bf16.msra.mxu0 0
        %735 = vmatprep.mubr.bf16.mxu0 0
        %736 = vmatmul.mubr.bf16.gmra.mxu0 %v701
        %v737 = vpop.f32.mrf.mxu0
        %v738 = vadd.f32 %v674, %v737
        %v739 = vpop.f32.mrf.mxu0
        %v740 = vpop.f32.mrf.mxu0
        %v741 = vadd.f32 %v674, %v740
        %v742 = vpop.f32.mrf.mxu0
        %743 = vdwg.mxu0
        %vm744 = vcmask 97280
        %745 = vst.msk [vmem:[%s257] sm:$0xff] %vm744, %v738
        %746 = vst.msk [vmem:[%s257 + $0x8] sm:$0xff] %vm744, %v741
        %s747 = sand.u32 %s159, 1
        %s748 = scalar_lea.sflag [#allocation3], %s747
        %s749 = sand.u32 %s159, 1
        %s750 = smul.addr %s749, 16
        %s751 = scalar_lea.vmem [#allocation2], %s750
        // Predicated region
        $region45: #{denoiser_forward.1} parent=43 // pred_check
          %p752 = pneg %p169
        $region46: #{denoiser_forward.1} parent=43 // pred_check_branch
          %754 = sbr.rel (%p752) target = $region48
        $region47: #{denoiser_forward.1} parent=43 // pred_region
          %s755 = smul.u32 2, %s20
          %s756 = ssub.s32 3, %s755
          %p757 = scmp.lt.s32.totalorder %s756, 2
          %s758 = scalar_select %p757, %s756, 2
          %s759 = smul.u32 128, %s758
          %s761 = ssub.s32 256, %s759
          %762 = vsyncadd %s748, %s761
          %p763 = scmp.ne.s32.totalorder 0, %s759
          %s764 = smul.addr %s755, 128
          %s765 = scalar_lea.hbm %s6, %s764
          %s766 = smul.u32 8, %s758
          %s767 = sshll.u32 %s751, 4
          %s768 = int_to_ptr.vmem [resolvable:$true] %s767
          %s769 = sshll.u32 %s766, 4
          %773 = dma.vmem_to_hbm [thread:$0]  (%p763), %s768, %s769, %s765, %s748, 128, 128, 8
        $region48: #{denoiser_forward.1} parent=43 // pred_fallthru
          _
      $region44: #{denoiser_forward.1} parent=5 // pred_fallthru
        _
      %p774 = scmp.le.s32.totalorder 2, %s15
      // Predicated region
      $region49: #{denoiser_forward.1} parent=5 // pred_check
        %p775 = pneg %p774
      $region50: #{denoiser_forward.1} parent=5 // pred_check_branch
        %777 = sbr.rel (%p775) target = $region52
      $region51: #{denoiser_forward.1} parent=5 // pred_region
        %s778 = ssub.s32 %s15, 2
        // Predicated region
        $region53: #{denoiser_forward.1} parent=51 // pred_check
          %p779 = pneg %p175
        $region54: #{denoiser_forward.1} parent=51 // pred_check_branch
          %781 = sbr.rel (%p779) target = $region56
        $region55: #{denoiser_forward.1} parent=51 // pred_region
          %s782 = sand.u32 %s160, 1
          %s783 = scalar_lea.sflag [#allocation3], %s782
          %s784 = sand.u32 %s160, 1
          %s785 = smul.addr %s784, 16
          %s786 = scalar_lea.vmem [#allocation2], %s785
          %787 = dma.done %s783, 256
        $region56: #{denoiser_forward.1} parent=51 // pred_fallthru
          _
      $region52: #{denoiser_forward.1} parent=5 // pred_fallthru
        _
    $region6: #{denoiser_forward.1} parent=1 // loop_footer
      %s19 = sadd.s32 1, %s15
    $region7: #{denoiser_forward.1} parent=1 // loop_footer_branch
      %14 = sbr.rel target = $region3
    $region8: #{denoiser_forward.1} parent=1 // loop_exit
      _
    %788 = vsyncpa [#allocation3], 1
    %s789 = scalar_lea.sflag [#allocation3], 1
    %790 = vsyncpa %s789, 1

</llo_original>
